<compile_context>
chip_gen: v7x
topology: tpu7x:2x2x1
jax: 0.10.0
libtpu: 0.0.40
codegen_flags: <defaults>
</compile_context>

<pallas_src>
import math

import jax
import jax.numpy as jnp
from jax.experimental import pallas as pl
from jax.experimental.pallas import tpu as pltpu


def _critic_kernel(x_ref, w1_ref, b1_ref, w2_ref, b2_ref, w3_ref, b3_ref, o_ref):
    """One batch tile of the fused 3-layer MLP (native (B, F) layout).

    x_ref : (tb, F)   input tile, f32 straight from HBM
    w*    : (in, out) resident weight tiles (f32 or bf16)
    b*    : (1, out)  resident f32 bias rows
    o_ref : (tb, 1)   value-head output tile (f32)
    """
    # In-kernel cast to the MXU compute dtype: no extra HBM traffic.
    x = x_ref[...].astype(w1_ref.dtype)
    # Layer 1: relu(x @ W1t + b1) -> (tb, H1); MXU matmul, f32 accumulate.
    h1 = jnp.dot(x, w1_ref[...], preferred_element_type=jnp.float32)
    h1 = jnp.maximum(h1 + b1_ref[...], 0.0)
    # Layer 2: relu(h1 @ W2t + b2) -> (tb, H2).
    h2 = jnp.dot(h1.astype(w2_ref.dtype), w2_ref[...],
                 preferred_element_type=jnp.float32)
    h2 = jnp.maximum(h2 + b2_ref[...], 0.0)
    # Layer 3 (value head): h2 @ W3t + b3 -> (tb, 1).
    v = jnp.dot(h2.astype(w3_ref.dtype), w3_ref[...],
                preferred_element_type=jnp.float32)
    o_ref[...] = (v + b3_ref[...]).astype(o_ref.dtype)


def _choose_tile_b(B, F, x_itemsize, *, target_block_bytes=1 << 20, max_tile=16384):
    """Pick the batch tile:
       - ~1 MiB x block (amortizes the ~0.35 us per-grid-step overhead),
       - capped at 16384 rows so the (tb, 64) f32 intermediates stay well
         inside v7x's 64 MiB physical VMEM,
       - multiple of 8 (sublane) so partial blocks only appear as the final
         remainder,
       - split into >= 2 tiles for large single-tile batches (v7x megacore)."""
    if B <= 8:
        return B                       # full-dim block, always legal
    tb = target_block_bytes // max(1, F * x_itemsize)
    tb = min(tb, max_tile, (B // 8) * 8)
    tb = max(8, (tb // 8) * 8)
    if tb * 2 > B and B >= 4096:
        tb = max(8, ((B // 2) // 8) * 8)
    return tb


def critic_forward(x, params, *, compute_dtype=jnp.float32, tile_b=None):
    """Critic forward pass.  x: (B, feature_dim) f32 -> (B, 1) f32.

    params = (w1, b1, w2, b2, w3, b3) in PyTorch-native layout:
      w1: (64, F)  b1: (64,)   w2: (64, 64)  b2: (64,)   w3: (1, 64)  b3: (1,)
    compute_dtype controls the dtype fed to the MXU (f32 or bf16); x is read
    from HBM in its own dtype and cast inside the kernel; bias add, ReLU and
    accumulation always run in f32.
    """
    w1, b1, w2, b2, w3, b3 = params
    B, F = x.shape
    H1, H2, O = w1.shape[0], w2.shape[0], w3.shape[0]

    if tile_b is None:
        tile_b = _choose_tile_b(B, F, x.dtype.itemsize)
    tb = int(tile_b)
    num_tiles = pl.cdiv(B, tb)

    # Tiny resident operands: pre-transpose to (in, out) and pre-cast once.
    w1t = w1.T.astype(compute_dtype)
    w2t = w2.T.astype(compute_dtype)
    w3t = w3.T.astype(compute_dtype)
    b1r = b1.astype(jnp.float32).reshape(1, H1)
    b2r = b2.astype(jnp.float32).reshape(1, H2)
    b3r = b3.astype(jnp.float32).reshape(1, O)

    def resident(shape):
        # Whole (small) array as one block; constant block index -> stays
        # resident in VMEM across batch-tile iterations (no re-DMA).
        return pl.BlockSpec(shape, lambda i: (0, 0))

    flops = 2 * B * (F * H1 + H1 * H2 + H2 * O)
    bytes_accessed = (
        x.size * x.dtype.itemsize
        + B * O * 4
        + sum(a.size * a.dtype.itemsize
              for a in (w1t, b1r, w2t, b2r, w3t, b3r))
    )

    out = pl.pallas_call(
        _critic_kernel,
        out_shape=jax.ShapeDtypeStruct((B, O), jnp.float32),
        grid=(num_tiles,),
        in_specs=[
            pl.BlockSpec((tb, F), lambda i: (i, 0)),   # x tile, native layout
            resident((F, H1)),
            resident((1, H1)),
            resident((H1, H2)),
            resident((1, H2)),
            resident((H2, O)),
            resident((1, O)),
        ],
        out_specs=pl.BlockSpec((tb, O), lambda i: (i, 0)),
        compiler_params=pltpu.CompilerParams(
            dimension_semantics=("parallel",),
            # Working set (2x x-buffer + h1 + h2 + residents) is well under
            # 32 MiB for the chosen tiles; fits scoped VMEM on v6e/v7x and
            # within v5e's 128 MiB physical.
            vmem_limit_bytes=32 * 1024 * 1024,
        ),
        cost_estimate=pl.CostEstimate(
            flops=flops, transcendentals=0, bytes_accessed=bytes_accessed),
    )(x, w1t, b1r, w2t, b2r, w3t, b3r)

    return out


def init_params(key, feature_dim):
    """PyTorch nn.Linear default init, PyTorch-native layout:
    W: (out, in), b: (out,), both ~ U(-1/sqrt(fan_in), 1/sqrt(fan_in))."""
    dims = [(feature_dim, 64), (64, 64), (64, 1)]
    params = []
    for fan_in, fan_out in dims:
        key, kw, kb = jax.random.split(key, 3)
        bound = 1.0 / math.sqrt(fan_in)
        w = jax.random.uniform(kw, (fan_out, fan_in), jnp.float32, -bound, bound)
        b = jax.random.uniform(kb, (fan_out,), jnp.float32, -bound, bound)
        params.extend([w, b])
    return params


def reference_forward(x, params):
    w1, b1, w2, b2, w3, b3 = params
    h = jnp.maximum(x @ w1.T + b1, 0.0)
    h = jnp.maximum(h @ w2.T + b2, 0.0)
    return h @ w3.T + b3


if __name__ == "__main__":
    key = jax.random.PRNGKey(0)
    feature_dim = 32
    batch = 8

    key, kx = jax.random.split(key)
    x = jax.random.normal(kx, (batch, feature_dim), jnp.float32)
    params = init_params(key, feature_dim)

    ref = reference_forward(x, params)

    # f32 path: exact match against the PyTorch-equivalent reference.
    out_f32 = jax.block_until_ready(critic_forward(x, params))
    assert out_f32.shape == (batch, 1)
    assert jnp.allclose(out_f32, ref, atol=1e-5, rtol=1e-5)

    # bf16-MXU path: x read as f32, cast in-kernel; f32 accumulate/elementwise.
    # Weight + intermediate-activation rounding -> loose tolerance.
    out_bf16 = jax.block_until_ready(
        critic_forward(x, params, compute_dtype=jnp.bfloat16))
    assert out_bf16.shape == (batch, 1)
    assert jnp.allclose(out_bf16, ref, atol=5e-2, rtol=5e-2)

    # Multi-tile grid + partial final block (masked remainder writes).
    key, kx2 = jax.random.split(key)
    x2 = jax.random.normal(kx2, (200, feature_dim), jnp.float32)
    ref2 = reference_forward(x2, params)
    out2 = jax.block_until_ready(critic_forward(x2, params, tile_b=64))
    assert out2.shape == (200, 1)
    assert jnp.allclose(out2, ref2, atol=1e-5, rtol=1e-5)

    print("KERNEL_OK")
</pallas_src>

<mosaic_0001>
module attributes {stable_mosaic.version = 11 : i64} {
  func.func @_critic_kernel(%arg0: i32, %arg1: memref<8x32xf32, #tpu.memory_space<vmem>>, %arg2: memref<32x64xf32, #tpu.memory_space<vmem>>, %arg3: memref<1x64xf32, #tpu.memory_space<vmem>>, %arg4: memref<64x64xf32, #tpu.memory_space<vmem>>, %arg5: memref<1x64xf32, #tpu.memory_space<vmem>>, %arg6: memref<64x1xf32, #tpu.memory_space<vmem>>, %arg7: memref<1x1xf32, #tpu.memory_space<vmem>>, %arg8: memref<8x1xf32, #tpu.memory_space<vmem>>) attributes {dimension_semantics = [#tpu.dimension_semantics<parallel>], iteration_bounds = array<i64: 1>, scalar_prefetch = 0 : i64, scratch_operands = 0 : i64, tpu.core_type = #tpu.core_type<tc>, window_params = [{transform_indices = @transform_0, window_bounds = array<i64: 8, 32>}, {pipeline_mode = #tpu.pipeline_mode<synchronous>, transform_indices = @transform_1, window_bounds = array<i64: 32, 64>}, {pipeline_mode = #tpu.pipeline_mode<synchronous>, transform_indices = @transform_2, window_bounds = array<i64: 1, 64>}, {pipeline_mode = #tpu.pipeline_mode<synchronous>, transform_indices = @transform_3, window_bounds = array<i64: 64, 64>}, {pipeline_mode = #tpu.pipeline_mode<synchronous>, transform_indices = @transform_4, window_bounds = array<i64: 1, 64>}, {pipeline_mode = #tpu.pipeline_mode<synchronous>, transform_indices = @transform_5, window_bounds = array<i64: 64, 1>}, {pipeline_mode = #tpu.pipeline_mode<synchronous>, transform_indices = @transform_6, window_bounds = array<i64: 1, 1>}, {transform_indices = @transform_7, window_bounds = array<i64: 8, 1>}]} {
    %c0 = arith.constant 0 : index
    %c0_0 = arith.constant 0 : index
    %0 = vector.load %arg1[%c0, %c0_0] : memref<8x32xf32, #tpu.memory_space<vmem>>, vector<8x32xf32>
    %c0_1 = arith.constant 0 : index
    %c0_2 = arith.constant 0 : index
    %1 = vector.load %arg2[%c0_1, %c0_2] : memref<32x64xf32, #tpu.memory_space<vmem>>, vector<32x64xf32>
    %cst = arith.constant dense<0.000000e+00> : vector<8x64xf32>
    %2 = tpu.matmul %0, %1, %cst {dimension_numbers = #tpu.dot_dimension_numbers<[1], [0], [0], [1], [0, 0, 1, 1], [], []>} : vector<8x32xf32>, vector<32x64xf32>, vector<8x64xf32> -> vector<8x64xf32>
    %c0_3 = arith.constant 0 : index
    %c0_4 = arith.constant 0 : index
    %3 = vector.load %arg3[%c0_3, %c0_4] : memref<1x64xf32, #tpu.memory_space<vmem>>, vector<1x64xf32>
    %4 = vector.broadcast %3 : vector<1x64xf32> to vector<8x64xf32>
    %5 = arith.addf %2, %4 : vector<8x64xf32>
    %cst_5 = arith.constant 0.000000e+00 : f32
    %6 = vector.broadcast %cst_5 : f32 to vector<8x64xf32>
    %7 = arith.maximumf %5, %6 : vector<8x64xf32>
    %c0_6 = arith.constant 0 : index
    %c0_7 = arith.constant 0 : index
    %8 = vector.load %arg4[%c0_6, %c0_7] : memref<64x64xf32, #tpu.memory_space<vmem>>, vector<64x64xf32>
    %cst_8 = arith.constant dense<0.000000e+00> : vector<8x64xf32>
    %9 = tpu.matmul %7, %8, %cst_8 {dimension_numbers = #tpu.dot_dimension_numbers<[1], [0], [0], [1], [0, 0, 1, 1], [], []>} : vector<8x64xf32>, vector<64x64xf32>, vector<8x64xf32> -> vector<8x64xf32>
    %c0_9 = arith.constant 0 : index
    %c0_10 = arith.constant 0 : index
    %10 = vector.load %arg5[%c0_9, %c0_10] : memref<1x64xf32, #tpu.memory_space<vmem>>, vector<1x64xf32>
    %11 = vector.broadcast %10 : vector<1x64xf32> to vector<8x64xf32>
    %12 = arith.addf %9, %11 : vector<8x64xf32>
    %cst_11 = arith.constant 0.000000e+00 : f32
    %13 = vector.broadcast %cst_11 : f32 to vector<8x64xf32>
    %14 = arith.maximumf %12, %13 : vector<8x64xf32>
    %c0_12 = arith.constant 0 : index
    %c0_13 = arith.constant 0 : index
    %15 = vector.load %arg6[%c0_12, %c0_13] : memref<64x1xf32, #tpu.memory_space<vmem>>, vector<64x1xf32>
    %cst_14 = arith.constant dense<0.000000e+00> : vector<8x1xf32>
    %16 = tpu.matmul %14, %15, %cst_14 {dimension_numbers = #tpu.dot_dimension_numbers<[1], [0], [0], [1], [0, 0, 1, 1], [], []>} : vector<8x64xf32>, vector<64x1xf32>, vector<8x1xf32> -> vector<8x1xf32>
    %c0_15 = arith.constant 0 : index
    %c0_16 = arith.constant 0 : index
    %17 = vector.load %arg7[%c0_15, %c0_16] : memref<1x1xf32, #tpu.memory_space<vmem>>, vector<1x1xf32>
    %18 = vector.broadcast %17 : vector<1x1xf32> to vector<8x1xf32>
    %19 = arith.addf %16, %18 : vector<8x1xf32>
    %c0_17 = arith.constant 0 : index
    %c0_18 = arith.constant 0 : index
    %20 = vector.load %arg8[%c0_17, %c0_18] : memref<8x1xf32, #tpu.memory_space<vmem>>, vector<8x1xf32>
    tpu.vector_store %arg8[%c0_17, %c0_18], %19 {strides = array<i32>} : memref<8x1xf32, #tpu.memory_space<vmem>>, vector<8x1xf32>,
    return
  }
  func.func @transform_0(%arg0: i32) -> (i32, i32) {
    %c0_i32 = arith.constant 0 : i32
    %c0_i32_0 = arith.constant 0 : i32
    return %arg0, %c0_i32 : i32, i32
  }
  func.func @transform_1(%arg0: i32) -> (i32, i32) {
    %c0_i32 = arith.constant 0 : i32
    %c0_i32_0 = arith.constant 0 : i32
    %c0_i32_1 = arith.constant 0 : i32
    return %c0_i32, %c0_i32_0 : i32, i32
  }
  func.func @transform_2(%arg0: i32) -> (i32, i32) {
    %c0_i32 = arith.constant 0 : i32
    %c0_i32_0 = arith.constant 0 : i32
    %c0_i32_1 = arith.constant 0 : i32
    return %c0_i32, %c0_i32_0 : i32, i32
  }
  func.func @transform_3(%arg0: i32) -> (i32, i32) {
    %c0_i32 = arith.constant 0 : i32
    %c0_i32_0 = arith.constant 0 : i32
    %c0_i32_1 = arith.constant 0 : i32
    return %c0_i32, %c0_i32_0 : i32, i32
  }
  func.func @transform_4(%arg0: i32) -> (i32, i32) {
    %c0_i32 = arith.constant 0 : i32
    %c0_i32_0 = arith.constant 0 : i32
    %c0_i32_1 = arith.constant 0 : i32
    return %c0_i32, %c0_i32_0 : i32, i32
  }
  func.func @transform_5(%arg0: i32) -> (i32, i32) {
    %c0_i32 = arith.constant 0 : i32
    %c0_i32_0 = arith.constant 0 : i32
    %c0_i32_1 = arith.constant 0 : i32
    return %c0_i32, %c0_i32_0 : i32, i32
  }
  func.func @transform_6(%arg0: i32) -> (i32, i32) {
    %c0_i32 = arith.constant 0 : i32
    %c0_i32_0 = arith.constant 0 : i32
    %c0_i32_1 = arith.constant 0 : i32
    return %c0_i32, %c0_i32_0 : i32, i32
  }
  func.func @transform_7(%arg0: i32) -> (i32, i32) {
    %c0_i32 = arith.constant 0 : i32
    %c0_i32_0 = arith.constant 0 : i32
    return %arg0, %c0_i32 : i32, i32
  }
}

</mosaic_0001>

<llo_original>
// kernel: tpu_custom_call.1
$region0: #{tpu_custom_call.1}
  #allocation0 [shape = 'u32[]', space=smem, size = 0x4, offset = 0x4, fixed_abs, tag = 'smem constant byte address 0x4 - core index']
  #allocation1 [shape = 'u32[144,128]{1,0:T(1,128)}', space=vmem, size = 0x12000, scoped, tag = 'internal scratch']
  #allocation2 [shape = 'f32[1,1]{1,0:T(1,128)S(1)}', space=vmem, size = 0x200, scoped, tag = 'scoped memory for tpu_custom_call.1']
  %s0 = inlined_call_operand.vmem [shape: f32[8,32], index: 0, kind: input, shape index: {}]
  %s1 = inlined_call_operand.hbm [shape: f32[32,64], index: 1, kind: input, shape index: {}]
  %s2 = inlined_call_operand.vmem [shape: f32[1,64], index: 2, kind: input, shape index: {}]
  %s3 = inlined_call_operand.vmem [shape: f32[64,64], index: 3, kind: input, shape index: {}]
  %s4 = inlined_call_operand.vmem [shape: f32[1,64], index: 4, kind: input, shape index: {}]
  %s5 = inlined_call_operand.vmem [shape: f32[64,1], index: 5, kind: input, shape index: {}]
  %s6 = inlined_call_operand.<no memory space> [shape: f32[1,1], index: 6, kind: input, shape index: {}]
  %s7 = inlined_call_operand.vmem [shape: f32[8,1], index: 7, kind: output, shape index: {}]
  %s8 = sld [smem:[#allocation0]]
  $region42: #{tpu_custom_call.1} parent=0
    _
  %s10 = ssub.s32 1, %s8
  %s11 = scalar_select 0, %s10, %s8
  %v12 = vstv %s6
  %13 = vst [vmem:[#allocation2] sm:$0x1] %v12
  $region1: #{tpu_custom_call.1} parent=0
    #allocation3 [shape = 'u8[16384]{0}', space=vmem, size = 0x4000, scoped, tag = 'input window, operand 1, single buffered']
    #allocation4 [shape = 's32[1]{0}', space=sflag, size = 0x4, scoped, tag = 'scoped memory for tpu_custom_call.1']
    %14 = vsyncpa [#allocation4], 0
    // Predicated region
    $region2: #{tpu_custom_call.1} parent=1 // pred_check
      _
    $region3: #{tpu_custom_call.1} parent=1 // pred_check_branch
      %16 = sbr.rel (0) target = $region5
    $region4: #{tpu_custom_call.1} parent=1 // pred_region
      _
    $region5: #{tpu_custom_call.1} parent=1 // pred_fallthru
      _
    // Predicated region
    $region6: #{tpu_custom_call.1} parent=1 // pred_check
      _
    $region7: #{tpu_custom_call.1} parent=1 // pred_check_branch
      %18 = sbr.rel (0) target = $region9
    $region8: #{tpu_custom_call.1} parent=1 // pred_region
      %s20 = ssub.s32 512, 512
      %21 = vsyncadd [#allocation4], %s20
      %s22 = sshll.u32 [#allocation3], 4
      %s23 = int_to_ptr.vmem [resolvable:$true] %s22
      %28 = dma.hbm_to_vmem [thread:$0]  %s1, 512, %s23, [#allocation4], 128, 128, 8
    $region9: #{tpu_custom_call.1} parent=1 // pred_fallthru
      _
    // Predicated region
    $region10: #{tpu_custom_call.1} parent=1 // pred_check
      _
    $region11: #{tpu_custom_call.1} parent=1 // pred_check_branch
      %30 = sbr.rel (0) target = $region13
    $region12: #{tpu_custom_call.1} parent=1 // pred_region
      _
    $region13: #{tpu_custom_call.1} parent=1 // pred_fallthru
      _
    // Predicated region
    $region14: #{tpu_custom_call.1} parent=1 // pred_check
      _
    $region15: #{tpu_custom_call.1} parent=1 // pred_check_branch
      %32 = sbr.rel (0) target = $region17
    $region16: #{tpu_custom_call.1} parent=1 // pred_region
      _
    $region17: #{tpu_custom_call.1} parent=1 // pred_fallthru
      _
    // Predicated region
    $region18: #{tpu_custom_call.1} parent=1 // pred_check
      _
    $region19: #{tpu_custom_call.1} parent=1 // pred_check_branch
      %34 = sbr.rel (0) target = $region21
    $region20: #{tpu_custom_call.1} parent=1 // pred_region
      _
    $region21: #{tpu_custom_call.1} parent=1 // pred_fallthru
      _
    // Predicated region
    $region22: #{tpu_custom_call.1} parent=1 // pred_check
      _
    $region23: #{tpu_custom_call.1} parent=1 // pred_check_branch
      %36 = sbr.rel (0) target = $region25
    $region24: #{tpu_custom_call.1} parent=1 // pred_region
      _
    $region25: #{tpu_custom_call.1} parent=1 // pred_fallthru
      _
    // Predicated region
    $region26: #{tpu_custom_call.1} parent=1 // pred_check
      _
    $region27: #{tpu_custom_call.1} parent=1 // pred_check_branch
      %38 = sbr.rel (0) target = $region29
    $region28: #{tpu_custom_call.1} parent=1 // pred_region
      _
    $region29: #{tpu_custom_call.1} parent=1 // pred_fallthru
      _
    // Predicated region
    $region30: #{tpu_custom_call.1} parent=1 // pred_check
      _
    $region31: #{tpu_custom_call.1} parent=1 // pred_check_branch
      %40 = sbr.rel (0) target = $region33
    $region32: #{tpu_custom_call.1} parent=1 // pred_region
      %41 = dma.done [#allocation4], 512
    $region33: #{tpu_custom_call.1} parent=1 // pred_fallthru
      _
    %v42 = vld [vmem:[%s0] sm:$0xff]
    %v43 = vld [vmem:[#allocation3] sm:$0xff]
    %v44 = vld [vmem:[#allocation3 + $0x8] sm:$0xff]
    %v45 = vld [vmem:[#allocation3 + $0x10] sm:$0xff]
    %v46 = vld [vmem:[#allocation3 + $0x18] sm:$0xff]
    %v47 = vld [vmem:[%s2] sm:$0x1]
    %v49 = vlaneseq
    %v50 = vshrl.u32 %v49, 7
    %v51 = vsub.s32 0, %v50
    %v52 = vrot.slane %v47, %v51
    %vm54 = vcmask 261120
    %v56 = vsel %vm54, %v42, 0
    %58 = vmatprep.subr.mxu0 0.0
    %59 = vmatpush1.msra.mxu0 %v43
    %60 = vmatprep.subr.mxu0 0.0
    %61 = vmatpush1.msra.mxu0 %v44
    %62 = vmatprep.subr.mxu0 0.0
    %63 = vmatpush1.msra.mxu0 %v45
    %64 = vmatprep.subr.mxu0 0.0
    %65 = vmatpush1.msra.mxu0 %v46
    %66 = vmatprep.subr.mxu0 0.0
    %67 = vmatpush1.msra.mxu0 0.0
    %68 = vmatprep.subr.mxu0 0.0
    %69 = vmatpush1.msra.mxu0 0.0
    %70 = vmatprep.subr.mxu0 0.0
    %71 = vmatpush1.msra.mxu0 0.0
    %72 = vmatprep.subr.mxu0 0.0
    %73 = vmatpush1.msra.mxu0 0.0
    %74 = vmatprep.subr.mxu0 0.0
    %75 = vmatpush1.msra.mxu0 0.0
    %76 = vmatprep.subr.mxu0 0.0
    %77 = vmatpush1.msra.mxu0 0.0
    %78 = vmatprep.subr.mxu0 0.0
    %79 = vmatpush1.msra.mxu0 0.0
    %80 = vmatprep.subr.mxu0 0.0
    %81 = vmatpush1.msra.mxu0 0.0
    %82 = vmatprep.subr.mxu0 0.0
    %83 = vmatpush1.msra.mxu0 0.0
    %84 = vmatprep.subr.mxu0 0.0
    %85 = vmatpush1.msra.mxu0 0.0
    %86 = vmatprep.subr.mxu0 0.0
    %87 = vmatpush1.msra.mxu0 0.0
    %88 = vmatprep.subr.mxu0 0.0
    %89 = vmatpush1.msra.mxu0 0.0
    %90 = vmatprep.subr.mxu0 0.0
    %91 = vmatpush1.msra.mxu0 0.0
    %92 = vmatprep.subr.mxu0 0.0
    %93 = vmatpush1.msra.mxu0 0.0
    %94 = vmatprep.subr.mxu0 0.0
    %95 = vmatpush1.msra.mxu0 0.0
    %96 = vmatprep.subr.mxu0 0.0
    %97 = vmatpush1.msra.mxu0 0.0
    %98 = vmatprep.subr.mxu0 0.0
    %99 = vmatpush1.msra.mxu0 0.0
    %100 = vmatprep.subr.mxu0 0.0
    %101 = vmatpush1.msra.mxu0 0.0
    %102 = vmatprep.subr.mxu0 0.0
    %103 = vmatpush1.msra.mxu0 0.0
    %104 = vmatprep.subr.mxu0 0.0
    %105 = vmatpush1.msra.mxu0 0.0
    %106 = vmatprep.subr.mxu0 0.0
    %107 = vmatpush1.msra.mxu0 0.0
    %108 = vmatprep.subr.mxu0 0.0
    %109 = vmatpush1.msra.mxu0 0.0
    %110 = vmatprep.subr.mxu0 0.0
    %111 = vmatpush1.msra.mxu0 0.0
    %112 = vmatprep.subr.mxu0 0.0
    %113 = vmatpush1.msra.mxu0 0.0
    %114 = vmatprep.subr.mxu0 0.0
    %115 = vmatpush1.msra.mxu0 0.0
    %116 = vmatprep.subr.mxu0 0.0
    %117 = vmatpush1.msra.mxu0 0.0
    %118 = vmatprep.subr.mxu0 0.0
    %119 = vmatpush1.msra.mxu0 0.0
    %120 = vmatprep.subr.mxu0 0.0
    %121 = vmatpush1.msra.mxu0 0.0
    %122 = vmatprep.mubr.f32.mxu0 0.0
    %123 = vmatmul.mubr.f32.gmra.mrb[0].mxu0 %v56
    %v124 = vpop.f32.mrb[0].mxu0
    %v125 = vadd.f32 %v52, %v124
    %v126 = vpop.f32.mrb[0].mxu0
    %127 = vdwg.mxu0
    %v128 = vmax.f32 %v125, 0.0
    %v129 = vld [vmem:[%s3] sm:$0xff]
    %v130 = vld [vmem:[%s3 + $0x8] sm:$0xff]
    %v131 = vld [vmem:[%s3 + $0x10] sm:$0xff]
    %v132 = vld [vmem:[%s3 + $0x18] sm:$0xff]
    %v133 = vld [vmem:[%s3 + $0x20] sm:$0xff]
    %v134 = vld [vmem:[%s3 + $0x28] sm:$0xff]
    %v135 = vld [vmem:[%s3 + $0x30] sm:$0xff]
    %v136 = vld [vmem:[%s3 + $0x38] sm:$0xff]
    %v137 = vld [vmem:[%s4] sm:$0x1]
    %v139 = vlaneseq
    %v140 = vshrl.u32 %v139, 7
    %v141 = vsub.s32 0, %v140
    %v142 = vrot.slane %v137, %v141
    %vm144 = vcmask 523264
    %v146 = vsel %vm144, %v128, 0
    %148 = vmatprep.subr.mxu0 0.0
    %149 = vmatpush1.msra.mxu0 %v129
    %150 = vmatprep.subr.mxu0 0.0
    %151 = vmatpush1.msra.mxu0 %v130
    %152 = vmatprep.subr.mxu0 0.0
    %153 = vmatpush1.msra.mxu0 %v131
    %154 = vmatprep.subr.mxu0 0.0
    %155 = vmatpush1.msra.mxu0 %v132
    %156 = vmatprep.subr.mxu0 0.0
    %157 = vmatpush1.msra.mxu0 %v133
    %158 = vmatprep.subr.mxu0 0.0
    %159 = vmatpush1.msra.mxu0 %v134
    %160 = vmatprep.subr.mxu0 0.0
    %161 = vmatpush1.msra.mxu0 %v135
    %162 = vmatprep.subr.mxu0 0.0
    %163 = vmatpush1.msra.mxu0 %v136
    %164 = vmatprep.subr.mxu0 0.0
    %165 = vmatpush1.msra.mxu0 0.0
    %166 = vmatprep.subr.mxu0 0.0
    %167 = vmatpush1.msra.mxu0 0.0
    %168 = vmatprep.subr.mxu0 0.0
    %169 = vmatpush1.msra.mxu0 0.0
    %170 = vmatprep.subr.mxu0 0.0
    %171 = vmatpush1.msra.mxu0 0.0
    %172 = vmatprep.subr.mxu0 0.0
    %173 = vmatpush1.msra.mxu0 0.0
    %174 = vmatprep.subr.mxu0 0.0
    %175 = vmatpush1.msra.mxu0 0.0
    %176 = vmatprep.subr.mxu0 0.0
    %177 = vmatpush1.msra.mxu0 0.0
    %178 = vmatprep.subr.mxu0 0.0
    %179 = vmatpush1.msra.mxu0 0.0
    %180 = vmatprep.subr.mxu0 0.0
    %181 = vmatpush1.msra.mxu0 0.0
    %182 = vmatprep.subr.mxu0 0.0
    %183 = vmatpush1.msra.mxu0 0.0
    %184 = vmatprep.subr.mxu0 0.0
    %185 = vmatpush1.msra.mxu0 0.0
    %186 = vmatprep.subr.mxu0 0.0
    %187 = vmatpush1.msra.mxu0 0.0
    %188 = vmatprep.subr.mxu0 0.0
    %189 = vmatpush1.msra.mxu0 0.0
    %190 = vmatprep.subr.mxu0 0.0
    %191 = vmatpush1.msra.mxu0 0.0
    %192 = vmatprep.subr.mxu0 0.0
    %193 = vmatpush1.msra.mxu0 0.0
    %194 = vmatprep.subr.mxu0 0.0
    %195 = vmatpush1.msra.mxu0 0.0
    %196 = vmatprep.subr.mxu0 0.0
    %197 = vmatpush1.msra.mxu0 0.0
    %198 = vmatprep.subr.mxu0 0.0
    %199 = vmatpush1.msra.mxu0 0.0
    %200 = vmatprep.subr.mxu0 0.0
    %201 = vmatpush1.msra.mxu0 0.0
    %202 = vmatprep.subr.mxu0 0.0
    %203 = vmatpush1.msra.mxu0 0.0
    %204 = vmatprep.subr.mxu0 0.0
    %205 = vmatpush1.msra.mxu0 0.0
    %206 = vmatprep.subr.mxu0 0.0
    %207 = vmatpush1.msra.mxu0 0.0
    %208 = vmatprep.subr.mxu0 0.0
    %209 = vmatpush1.msra.mxu0 0.0
    %210 = vmatprep.subr.mxu0 0.0
    %211 = vmatpush1.msra.mxu0 0.0
    %212 = vmatprep.mubr.f32.mxu0 0.0
    %213 = vmatmul.mubr.f32.gmra.mrb[0].mxu0 %v146
    %v214 = vpop.f32.mrb[0].mxu0
    %v215 = vadd.f32 %v142, %v214
    %v216 = vpop.f32.mrb[0].mxu0
    %217 = vdwg.mxu0
    %v218 = vmax.f32 %v215, 0.0
    %v219 = vld [vmem:[%s5] sm:$0xff]
    %v220 = vld [vmem:[%s5 + $0x8] sm:$0xff]
    %v221 = vld [vmem:[%s5 + $0x10] sm:$0xff]
    %v222 = vld [vmem:[%s5 + $0x18] sm:$0xff]
    %v223 = vld [vmem:[%s5 + $0x20] sm:$0xff]
    %v224 = vld [vmem:[%s5 + $0x28] sm:$0xff]
    %v225 = vld [vmem:[%s5 + $0x30] sm:$0xff]
    %v226 = vld [vmem:[%s5 + $0x38] sm:$0xff]
    %v227 = vld [vmem:[#allocation2] sm:$0x1]
    %v229 = vlaneseq
    %v230 = vshrl.u32 %v229, 7
    %v231 = vsub.s32 0, %v230
    %v232 = vrot.slane %v227, %v231
    %v235 = vsel %vm144, %v218, 0
    %237 = vmatprep.subr.mxu0 0.0
    %238 = vmatpush1.msra.mxu0 %v219
    %239 = vmatprep.subr.mxu0 0.0
    %240 = vmatpush1.msra.mxu0 %v220
    %241 = vmatprep.subr.mxu0 0.0
    %242 = vmatpush1.msra.mxu0 %v221
    %243 = vmatprep.subr.mxu0 0.0
    %244 = vmatpush1.msra.mxu0 %v222
    %245 = vmatprep.subr.mxu0 0.0
    %246 = vmatpush1.msra.mxu0 %v223
    %247 = vmatprep.subr.mxu0 0.0
    %248 = vmatpush1.msra.mxu0 %v224
    %249 = vmatprep.subr.mxu0 0.0
    %250 = vmatpush1.msra.mxu0 %v225
    %251 = vmatprep.subr.mxu0 0.0
    %252 = vmatpush1.msra.mxu0 %v226
    %253 = vmatprep.subr.mxu0 0.0
    %254 = vmatpush1.msra.mxu0 0.0
    %255 = vmatprep.subr.mxu0 0.0
    %256 = vmatpush1.msra.mxu0 0.0
    %257 = vmatprep.subr.mxu0 0.0
    %258 = vmatpush1.msra.mxu0 0.0
    %259 = vmatprep.subr.mxu0 0.0
    %260 = vmatpush1.msra.mxu0 0.0
    %261 = vmatprep.subr.mxu0 0.0
    %262 = vmatpush1.msra.mxu0 0.0
    %263 = vmatprep.subr.mxu0 0.0
    %264 = vmatpush1.msra.mxu0 0.0
    %265 = vmatprep.subr.mxu0 0.0
    %266 = vmatpush1.msra.mxu0 0.0
    %267 = vmatprep.subr.mxu0 0.0
    %268 = vmatpush1.msra.mxu0 0.0
    %269 = vmatprep.subr.mxu0 0.0
    %270 = vmatpush1.msra.mxu0 0.0
    %271 = vmatprep.subr.mxu0 0.0
    %272 = vmatpush1.msra.mxu0 0.0
    %273 = vmatprep.subr.mxu0 0.0
    %274 = vmatpush1.msra.mxu0 0.0
    %275 = vmatprep.subr.mxu0 0.0
    %276 = vmatpush1.msra.mxu0 0.0
    %277 = vmatprep.subr.mxu0 0.0
    %278 = vmatpush1.msra.mxu0 0.0
    %279 = vmatprep.subr.mxu0 0.0
    %280 = vmatpush1.msra.mxu0 0.0
    %281 = vmatprep.subr.mxu0 0.0
    %282 = vmatpush1.msra.mxu0 0.0
    %283 = vmatprep.subr.mxu0 0.0
    %284 = vmatpush1.msra.mxu0 0.0
    %285 = vmatprep.subr.mxu0 0.0
    %286 = vmatpush1.msra.mxu0 0.0
    %287 = vmatprep.subr.mxu0 0.0
    %288 = vmatpush1.msra.mxu0 0.0
    %289 = vmatprep.subr.mxu0 0.0
    %290 = vmatpush1.msra.mxu0 0.0
    %291 = vmatprep.subr.mxu0 0.0
    %292 = vmatpush1.msra.mxu0 0.0
    %293 = vmatprep.subr.mxu0 0.0
    %294 = vmatpush1.msra.mxu0 0.0
    %295 = vmatprep.subr.mxu0 0.0
    %296 = vmatpush1.msra.mxu0 0.0
    %297 = vmatprep.subr.mxu0 0.0
    %298 = vmatpush1.msra.mxu0 0.0
    %299 = vmatprep.subr.mxu0 0.0
    %300 = vmatpush1.msra.mxu0 0.0
    %301 = vmatprep.mubr.f32.mxu0 0.0
    %302 = vmatmul.mubr.f32.gmra.mrb[0].mxu0 %v235
    %v303 = vpop.f32.mrb[0].mxu0
    %v304 = vadd.f32 %v232, %v303
    %v305 = vpop.f32.mrb[0].mxu0
    %306 = vdwg.mxu0
    %vm307 = vcmask 7168
    %308 = vst.msk [vmem:[%s7] sm:$0xff] %vm307, %v304
    // Predicated region
    $region34: #{tpu_custom_call.1} parent=1 // pred_check
      _
    $region35: #{tpu_custom_call.1} parent=1 // pred_check_branch
      %310 = sbr.rel (0) target = $region37
    $region36: #{tpu_custom_call.1} parent=1 // pred_region
      _
    $region37: #{tpu_custom_call.1} parent=1 // pred_fallthru
      _
    // Predicated region
    $region38: #{tpu_custom_call.1} parent=1 // pred_check
      _
    $region39: #{tpu_custom_call.1} parent=1 // pred_check_branch
      %312 = sbr.rel (0) target = $region41
    $region40: #{tpu_custom_call.1} parent=1 // pred_region
      _
    $region41: #{tpu_custom_call.1} parent=1 // pred_fallthru
      _
    %313 = vsyncpa [#allocation4], 1

</llo_original>
